<compile_context>
chip_gen: v6e
topology: v6e:2x2x1
jax: 0.10.0
libtpu: 0.0.40
codegen_flags: <defaults>
</compile_context>

<pallas_src>
import math

import jax
import jax.numpy as jnp
from jax.experimental import pallas as pl
from jax.experimental.pallas import tpu as pltpu

_LANE = 128  # TPU lane width; the final 1-wide logit column is padded to this.


def din_kernel(
    tgt_ref,    # [TB, D]      bf16  raw target embedding tile
    hist_ref,   # [TB, L, D]   bf16  raw history embedding tile
    mask_ref,   # [TB, L]      f32   (clk_seq != 0) mask tile
    wt_ref,     # [D, D]       bf16  target_trans weight
    bt_ref,     # [1, D]       f32   target_trans bias
    ws_ref,     # [D, D]       bf16  seq_trans weight
    bs_ref,     # [1, D]       f32   seq_trans bias
    wc1a_ref,   # [D, H]       bf16  classifier L1 weight (target half of concat)
    wc1b_ref,   # [D, H]       bf16  classifier L1 weight (attention half)
    bc1_ref,    # [1, H]       f32   classifier L1 bias
    wc2_ref,    # [H, LANE]    bf16  classifier L2 weight, lane-padded (col 0 real)
    bc2_ref,    # [1, LANE]    f32   classifier L2 bias, lane-padded
    out_ref,    # [TB, LANE]   f32   logits in column 0
):
    TB, L, D = hist_ref.shape
    scale = 1.0 / math.sqrt(D)
    f32 = jnp.float32
    bf16 = jnp.bfloat16

    # target_trans: tanh(x @ Wt + bt)   (bf16 MXU inputs, f32 accumulation)
    tgt = jnp.tanh(
        jnp.dot(tgt_ref[...], wt_ref[...], preferred_element_type=f32) + bt_ref[...]
    )  # [TB, D] f32

    # seq_trans applied to every history position: one 2-D MXU matmul over the
    # flattened view of the VMEM tile.
    hist_flat = hist_ref[...].reshape(TB * L, D)
    hist_t = jnp.tanh(
        jnp.dot(hist_flat, ws_ref[...], preferred_element_type=f32) + bs_ref[...]
    ).reshape(TB, L, D)  # [TB, L, D] f32

    # TargetAttention: scaled dot product + masked softmax via batched MXU
    # contractions (no [TB, L, D] broadcast temporaries on the VPU side).
    tgt_b16 = tgt.astype(bf16)          # [TB, D]
    hist_b16 = hist_t.astype(bf16)      # [TB, L, D]
    scores = (
        jnp.einsum(
            "bqd,bkd->bqk", tgt_b16[:, None, :], hist_b16,
            preferred_element_type=f32,
        )
        * scale
    )  # [TB, 1, L]
    mask = mask_ref[...][:, None, :]    # [TB, 1, L]
    scores = jnp.where(mask > 0.0, scores, -1e9)
    m = jnp.max(scores, axis=-1, keepdims=True)
    e = jnp.exp(scores - m)
    denom = jnp.sum(e, axis=-1, keepdims=True)
    p = e * pl.reciprocal(denom, approx=True)            # [TB, 1, L]
    agg = jnp.einsum(
        "bqk,bkd->bqd", p.astype(bf16), hist_b16, preferred_element_type=f32
    ).reshape(TB, D)                                      # [TB, D] f32

    # classifier on concat([tgt, agg]):  x @ Wc1 == tgt @ Wc1a + agg @ Wc1b
    h = jnp.tanh(
        jnp.dot(tgt_b16, wc1a_ref[...], preferred_element_type=f32)
        + jnp.dot(agg.astype(bf16), wc1b_ref[...], preferred_element_type=f32)
        + bc1_ref[...]
    )  # [TB, H] f32
    out_ref[...] = (
        jnp.dot(h.astype(bf16), wc2_ref[...], preferred_element_type=f32)
        + bc2_ref[...]
    )  # [TB, LANE]; only column 0 is a real logit.


def _full_spec(arr):
    """Whole-array block that stays resident across every grid step."""
    nd = arr.ndim

    def idx(i):
        return (0,) * nd

    return pl.BlockSpec(arr.shape, idx)


def make_params(key, vocab, dim, hidden):
    """Deterministic synthetic parameter init (shapes from the module __init__)."""
    ks = jax.random.split(key, 8)
    s = 0.1
    return {
        "embedding": jax.random.normal(ks[0], (vocab, dim), jnp.float32) * s,
        "wt": jax.random.normal(ks[1], (dim, dim), jnp.float32) * s,
        "bt": jnp.zeros((1, dim), jnp.float32),
        "ws": jax.random.normal(ks[2], (dim, dim), jnp.float32) * s,
        "bs": jnp.zeros((1, dim), jnp.float32),
        # classifier: StackedDense(2*dim, [hidden, 1], [Tanh, None])
        "wc1": jax.random.normal(ks[3], (2 * dim, hidden), jnp.float32) * s,
        "bc1": jnp.zeros((1, hidden), jnp.float32),
        "wc2": jax.random.normal(ks[4], (hidden, 1), jnp.float32) * s,
        "bc2": jnp.zeros((1, 1), jnp.float32),
    }


def din_forward(target_ids, clk_seq, params, *, block_b=128):
    """Embedding gather in plain JAX; transforms/attention/classifier in Pallas."""
    assert block_b % 8 == 0
    emb = params["embedding"]                          # [V, D] f32
    tgt_emb = emb[target_ids]                          # [B, D]
    hist_emb = emb[clk_seq]                            # [B, L, D]
    mask = (clk_seq != 0).astype(jnp.float32)          # [B, L]
    # TODO(synk): fuse the embedding gather into the kernel (PrefetchScalarGridSpec
    # scalar-prefetched ids + manual DMA from an HBM-resident table) to avoid the
    # extra HBM round trip of the gathered [B, L, D] history.

    B, L, D = hist_emb.shape
    H = params["wc1"].shape[1]

    # --- batch tiling: full batch if small, else block_b rows per grid step ---
    if B <= block_b:
        tb, bp = B, B
    else:
        tb = block_b
        bp = pl.cdiv(B, tb) * tb
    if bp != B:
        pad = bp - B
        tgt_emb = jnp.pad(tgt_emb, ((0, pad), (0, 0)))
        hist_emb = jnp.pad(hist_emb, ((0, pad), (0, 0), (0, 0)))
        mask = jnp.pad(mask, ((0, pad), (0, 0)))

    bf16 = jnp.bfloat16
    tgt_in = tgt_emb.astype(bf16)
    hist_in = hist_emb.astype(bf16)
    wt = params["wt"].astype(bf16)
    ws = params["ws"].astype(bf16)
    wc1a = params["wc1"][:D, :].astype(bf16)           # concat -> sum of two matmuls
    wc1b = params["wc1"][D:, :].astype(bf16)
    # Lane-dense output head: pad the 1-wide final layer to 128 lanes (zeros).
    wc2 = jnp.zeros((H, _LANE), bf16).at[:, 0:1].set(params["wc2"].astype(bf16))
    bc2 = jnp.zeros((1, _LANE), jnp.float32).at[:, 0:1].set(params["bc2"])

    weights = (wt, params["bt"], ws, params["bs"], wc1a, wc1b, params["bc1"], wc2, bc2)

    grid = (bp // tb,)
    in_specs = [
        pl.BlockSpec((tb, D), lambda i: (i, 0)),
        pl.BlockSpec((tb, L, D), lambda i: (i, 0, 0)),
        pl.BlockSpec((tb, L), lambda i: (i, 0)),
    ] + [_full_spec(w) for w in weights]
    out_specs = pl.BlockSpec((tb, _LANE), lambda i: (i, 0))

    # VMEM budget: double-buffered batch tiles + resident weights + headroom,
    # capped well below v7x's 64 MiB physical VMEM.
    tile_bytes = tb * L * D * 2 + tb * D * 2 + tb * L * 4 + tb * _LANE * 4
    w_bytes = sum(int(w.size) * w.dtype.itemsize for w in weights)
    vmem_limit = int(
        min(48 << 20, max(32 << 20, 2 * tile_bytes + 2 * w_bytes + (8 << 20)))
    )

    out = pl.pallas_call(
        din_kernel,
        out_shape=jax.ShapeDtypeStruct((bp, _LANE), jnp.float32),
        grid=grid,
        in_specs=in_specs,
        out_specs=out_specs,
        compiler_params=pltpu.CompilerParams(
            dimension_semantics=("parallel",),
            vmem_limit_bytes=vmem_limit,
        ),
    )(tgt_in, hist_in, mask, *weights)
    return out[:B, 0:1]


if __name__ == "__main__":
    B, L, D, H, VOCAB = 2, 8, 32, 64, 100

    key = jax.random.PRNGKey(0)
    k_ids, k_seq, k_params = jax.random.split(key, 3)

    params = make_params(k_params, VOCAB, D, H)

    target_ids = jax.random.randint(k_ids, (B,), 1, VOCAB, dtype=jnp.int32)
    clk_seq = jax.random.randint(k_seq, (B, L), 0, VOCAB, dtype=jnp.int32)
    # Force a couple of padding (id == 0) positions so the mask path is exercised.
    clk_seq = clk_seq.at[0, L - 1].set(0).at[1, L - 2].set(0)

    logits = din_forward(target_ids, clk_seq, params)
    jax.block_until_ready(logits)
    assert logits.shape == (B, 1) and logits.dtype == jnp.float32
    print("KERNEL_OK")
</pallas_src>

<mosaic_0001>
module attributes {stable_mosaic.version = 11 : i64} {
  func.func @din_kernel(%arg0: i32, %arg1: memref<2x32xbf16, #tpu.memory_space<vmem>>, %arg2: memref<2x8x32xbf16, #tpu.memory_space<vmem>>, %arg3: memref<2x8xf32, #tpu.memory_space<vmem>>, %arg4: memref<32x32xbf16, #tpu.memory_space<vmem>>, %arg5: memref<1x32xf32, #tpu.memory_space<vmem>>, %arg6: memref<32x32xbf16, #tpu.memory_space<vmem>>, %arg7: memref<1x32xf32, #tpu.memory_space<vmem>>, %arg8: memref<32x64xbf16, #tpu.memory_space<vmem>>, %arg9: memref<32x64xbf16, #tpu.memory_space<vmem>>, %arg10: memref<1x64xf32, #tpu.memory_space<vmem>>, %arg11: memref<64x128xbf16, #tpu.memory_space<vmem>>, %arg12: memref<1x128xf32, #tpu.memory_space<vmem>>, %arg13: memref<2x128xf32, #tpu.memory_space<vmem>>) attributes {dimension_semantics = [#tpu.dimension_semantics<parallel>], iteration_bounds = array<i64: 1>, scalar_prefetch = 0 : i64, scratch_operands = 0 : i64, tpu.core_type = #tpu.core_type<tc>, window_params = [{transform_indices = @transform_0, window_bounds = array<i64: 2, 32>}, {transform_indices = @transform_1, window_bounds = array<i64: 2, 8, 32>}, {transform_indices = @transform_2, window_bounds = array<i64: 2, 8>}, {pipeline_mode = #tpu.pipeline_mode<synchronous>, transform_indices = @transform_3, window_bounds = array<i64: 32, 32>}, {pipeline_mode = #tpu.pipeline_mode<synchronous>, transform_indices = @transform_4, window_bounds = array<i64: 1, 32>}, {pipeline_mode = #tpu.pipeline_mode<synchronous>, transform_indices = @transform_5, window_bounds = array<i64: 32, 32>}, {pipeline_mode = #tpu.pipeline_mode<synchronous>, transform_indices = @transform_6, window_bounds = array<i64: 1, 32>}, {pipeline_mode = #tpu.pipeline_mode<synchronous>, transform_indices = @transform_7, window_bounds = array<i64: 32, 64>}, {pipeline_mode = #tpu.pipeline_mode<synchronous>, transform_indices = @transform_8, window_bounds = array<i64: 32, 64>}, {pipeline_mode = #tpu.pipeline_mode<synchronous>, transform_indices = @transform_9, window_bounds = array<i64: 1, 64>}, {pipeline_mode = #tpu.pipeline_mode<synchronous>, transform_indices = @transform_10, window_bounds = array<i64: 64, 128>}, {pipeline_mode = #tpu.pipeline_mode<synchronous>, transform_indices = @transform_11, window_bounds = array<i64: 1, 128>}, {transform_indices = @transform_12, window_bounds = array<i64: 2, 128>}]} {
    %c0 = arith.constant 0 : index
    %c0_0 = arith.constant 0 : index
    %0 = vector.load %arg1[%c0, %c0_0] : memref<2x32xbf16, #tpu.memory_space<vmem>>, vector<2x32xbf16>
    %c0_1 = arith.constant 0 : index
    %c0_2 = arith.constant 0 : index
    %1 = vector.load %arg4[%c0_1, %c0_2] : memref<32x32xbf16, #tpu.memory_space<vmem>>, vector<32x32xbf16>
    %cst = arith.constant dense<0.000000e+00> : vector<2x32xf32>
    %2 = tpu.matmul %0, %1, %cst {dimension_numbers = #tpu.dot_dimension_numbers<[1], [0], [0], [1], [0, 0, 1, 1], [], []>} : vector<2x32xbf16>, vector<32x32xbf16>, vector<2x32xf32> -> vector<2x32xf32>
    %c0_3 = arith.constant 0 : index
    %c0_4 = arith.constant 0 : index
    %3 = vector.load %arg5[%c0_3, %c0_4] : memref<1x32xf32, #tpu.memory_space<vmem>>, vector<1x32xf32>
    %4 = vector.broadcast %3 : vector<1x32xf32> to vector<2x32xf32>
    %5 = arith.addf %2, %4 : vector<2x32xf32>
    %6 = math.tanh %5 : vector<2x32xf32>
    %c0_5 = arith.constant 0 : index
    %c0_6 = arith.constant 0 : index
    %c0_7 = arith.constant 0 : index
    %7 = vector.load %arg2[%c0_5, %c0_6, %c0_7] : memref<2x8x32xbf16, #tpu.memory_space<vmem>>, vector<2x8x32xbf16>
    %8 = vector.shape_cast %7 : vector<2x8x32xbf16> to vector<16x32xbf16>
    %c0_8 = arith.constant 0 : index
    %c0_9 = arith.constant 0 : index
    %9 = vector.load %arg6[%c0_8, %c0_9] : memref<32x32xbf16, #tpu.memory_space<vmem>>, vector<32x32xbf16>
    %cst_10 = arith.constant dense<0.000000e+00> : vector<16x32xf32>
    %10 = tpu.matmul %8, %9, %cst_10 {dimension_numbers = #tpu.dot_dimension_numbers<[1], [0], [0], [1], [0, 0, 1, 1], [], []>} : vector<16x32xbf16>, vector<32x32xbf16>, vector<16x32xf32> -> vector<16x32xf32>
    %c0_11 = arith.constant 0 : index
    %c0_12 = arith.constant 0 : index
    %11 = vector.load %arg7[%c0_11, %c0_12] : memref<1x32xf32, #tpu.memory_space<vmem>>, vector<1x32xf32>
    %12 = vector.broadcast %11 : vector<1x32xf32> to vector<16x32xf32>
    %13 = arith.addf %10, %12 : vector<16x32xf32>
    %14 = math.tanh %13 : vector<16x32xf32>
    %15 = vector.shape_cast %14 : vector<16x32xf32> to vector<2x8x32xf32>
    %16 = arith.truncf %6 : vector<2x32xf32> to vector<2x32xbf16>
    %17 = arith.truncf %15 : vector<2x8x32xf32> to vector<2x8x32xbf16>
    %18 = vector.shape_cast %16 : vector<2x32xbf16> to vector<2x1x32xbf16>
    "tpu.trace_start"() <{level = 10 : i32, message = "bqd,bkd->bqk"}> : () -> ()
    %cst_13 = arith.constant dense<0.000000e+00> : vector<2x1x8xf32>
    %19 = tpu.matmul %18, %17, %cst_13 {dimension_numbers = #tpu.dot_dimension_numbers<[2], [2], [1], [1], [0, 0, 0, 1, 1, 1], [0], [0]>} : vector<2x1x32xbf16>, vector<2x8x32xbf16>, vector<2x1x8xf32> -> vector<2x1x8xf32>
    "tpu.trace_stop"() : () -> ()
    %cst_14 = arith.constant 0.176776692 : f32
    %20 = vector.broadcast %cst_14 : f32 to vector<2x1x8xf32>
    %21 = arith.mulf %19, %20 : vector<2x1x8xf32>
    %c0_15 = arith.constant 0 : index
    %c0_16 = arith.constant 0 : index
    %22 = vector.load %arg3[%c0_15, %c0_16] : memref<2x8xf32, #tpu.memory_space<vmem>>, vector<2x8xf32>
    %23 = vector.shape_cast %22 : vector<2x8xf32> to vector<2x1x8xf32>
    %cst_17 = arith.constant 0.000000e+00 : f32
    %24 = vector.broadcast %cst_17 : f32 to vector<2x1x8xf32>
    %25 = arith.cmpf ogt, %23, %24 : vector<2x1x8xf32>
    %cst_18 = arith.constant -1.000000e+09 : f32
    %26 = vector.broadcast %cst_18 : f32 to vector<2x1x8xf32>
    %27 = arith.select %25, %21, %26 : vector<2x1x8xi1>, vector<2x1x8xf32>
    %cst_19 = arith.constant dense<0xFF800000> : vector<2x1xf32>
    %28 = vector.multi_reduction <maximumf>, %27, %cst_19 [2] : vector<2x1x8xf32> to vector<2x1xf32>
    %29 = vector.shape_cast %28 : vector<2x1xf32> to vector<2x1x1xf32>
    %30 = vector.broadcast %29 : vector<2x1x1xf32> to vector<2x1x8xf32>
    %31 = arith.subf %27, %30 : vector<2x1x8xf32>
    %32 = math.exp %31 : vector<2x1x8xf32>
    %cst_20 = arith.constant dense<0.000000e+00> : vector<2x1xf32>
    %33 = vector.multi_reduction <add>, %32, %cst_20 [2] : vector<2x1x8xf32> to vector<2x1xf32>
    %34 = vector.shape_cast %33 : vector<2x1xf32> to vector<2x1x1xf32>
    %35 = tpu.reciprocal %34 {approx = true} : vector<2x1x1xf32> -> vector<2x1x1xf32>
    %36 = vector.broadcast %35 : vector<2x1x1xf32> to vector<2x1x8xf32>
    %37 = arith.mulf %32, %36 : vector<2x1x8xf32>
    %38 = arith.truncf %37 : vector<2x1x8xf32> to vector<2x1x8xbf16>
    "tpu.trace_start"() <{level = 10 : i32, message = "bqk,bkd->bqd"}> : () -> ()
    %cst_21 = arith.constant dense<0.000000e+00> : vector<2x1x32xf32>
    %39 = tpu.matmul %38, %17, %cst_21 {dimension_numbers = #tpu.dot_dimension_numbers<[2], [1], [1], [2], [0, 0, 0, 1, 1, 2], [0], [0]>} : vector<2x1x8xbf16>, vector<2x8x32xbf16>, vector<2x1x32xf32> -> vector<2x1x32xf32>
    "tpu.trace_stop"() : () -> ()
    %40 = vector.shape_cast %39 : vector<2x1x32xf32> to vector<2x32xf32>
    %c0_22 = arith.constant 0 : index
    %c0_23 = arith.constant 0 : index
    %41 = vector.load %arg8[%c0_22, %c0_23] : memref<32x64xbf16, #tpu.memory_space<vmem>>, vector<32x64xbf16>
    %cst_24 = arith.constant dense<0.000000e+00> : vector<2x64xf32>
    %42 = tpu.matmul %16, %41, %cst_24 {dimension_numbers = #tpu.dot_dimension_numbers<[1], [0], [0], [1], [0, 0, 1, 1], [], []>} : vector<2x32xbf16>, vector<32x64xbf16>, vector<2x64xf32> -> vector<2x64xf32>
    %43 = arith.truncf %40 : vector<2x32xf32> to vector<2x32xbf16>
    %c0_25 = arith.constant 0 : index
    %c0_26 = arith.constant 0 : index
    %44 = vector.load %arg9[%c0_25, %c0_26] : memref<32x64xbf16, #tpu.memory_space<vmem>>, vector<32x64xbf16>
    %cst_27 = arith.constant dense<0.000000e+00> : vector<2x64xf32>
    %45 = tpu.matmul %43, %44, %cst_27 {dimension_numbers = #tpu.dot_dimension_numbers<[1], [0], [0], [1], [0, 0, 1, 1], [], []>} : vector<2x32xbf16>, vector<32x64xbf16>, vector<2x64xf32> -> vector<2x64xf32>
    %46 = arith.addf %42, %45 : vector<2x64xf32>
    %c0_28 = arith.constant 0 : index
    %c0_29 = arith.constant 0 : index
    %47 = vector.load %arg10[%c0_28, %c0_29] : memref<1x64xf32, #tpu.memory_space<vmem>>, vector<1x64xf32>
    %48 = vector.broadcast %47 : vector<1x64xf32> to vector<2x64xf32>
    %49 = arith.addf %46, %48 : vector<2x64xf32>
    %50 = math.tanh %49 : vector<2x64xf32>
    %51 = arith.truncf %50 : vector<2x64xf32> to vector<2x64xbf16>
    %c0_30 = arith.constant 0 : index
    %c0_31 = arith.constant 0 : index
    %52 = vector.load %arg11[%c0_30, %c0_31] : memref<64x128xbf16, #tpu.memory_space<vmem>>, vector<64x128xbf16>
    %cst_32 = arith.constant dense<0.000000e+00> : vector<2x128xf32>
    %53 = tpu.matmul %51, %52, %cst_32 {dimension_numbers = #tpu.dot_dimension_numbers<[1], [0], [0], [1], [0, 0, 1, 1], [], []>} : vector<2x64xbf16>, vector<64x128xbf16>, vector<2x128xf32> -> vector<2x128xf32>
    %c0_33 = arith.constant 0 : index
    %c0_34 = arith.constant 0 : index
    %54 = vector.load %arg12[%c0_33, %c0_34] : memref<1x128xf32, #tpu.memory_space<vmem>>, vector<1x128xf32>
    %55 = vector.broadcast %54 : vector<1x128xf32> to vector<2x128xf32>
    %56 = arith.addf %53, %55 : vector<2x128xf32>
    %c0_35 = arith.constant 0 : index
    %c0_36 = arith.constant 0 : index
    %57 = vector.load %arg13[%c0_35, %c0_36] : memref<2x128xf32, #tpu.memory_space<vmem>>, vector<2x128xf32>
    tpu.vector_store %arg13[%c0_35, %c0_36], %56 {strides = array<i32>} : memref<2x128xf32, #tpu.memory_space<vmem>>, vector<2x128xf32>,
    return
  }
  func.func @transform_0(%arg0: i32) -> (i32, i32) {
    %c0_i32 = arith.constant 0 : i32
    %c0_i32_0 = arith.constant 0 : i32
    return %arg0, %c0_i32 : i32, i32
  }
  func.func @transform_1(%arg0: i32) -> (i32, i32, i32) {
    %c0_i32 = arith.constant 0 : i32
    %c0_i32_0 = arith.constant 0 : i32
    %c0_i32_1 = arith.constant 0 : i32
    return %arg0, %c0_i32, %c0_i32_0 : i32, i32, i32
  }
  func.func @transform_2(%arg0: i32) -> (i32, i32) {
    %c0_i32 = arith.constant 0 : i32
    %c0_i32_0 = arith.constant 0 : i32
    return %arg0, %c0_i32 : i32, i32
  }
  func.func @transform_3(%arg0: i32) -> (i32, i32) {
    %c0_i32 = arith.constant 0 : i32
    %c0_i32_0 = arith.constant 0 : i32
    %c0_i32_1 = arith.constant 0 : i32
    return %c0_i32, %c0_i32_0 : i32, i32
  }
  func.func @transform_4(%arg0: i32) -> (i32, i32) {
    %c0_i32 = arith.constant 0 : i32
    %c0_i32_0 = arith.constant 0 : i32
    %c0_i32_1 = arith.constant 0 : i32
    return %c0_i32, %c0_i32_0 : i32, i32
  }
  func.func @transform_5(%arg0: i32) -> (i32, i32) {
    %c0_i32 = arith.constant 0 : i32
    %c0_i32_0 = arith.constant 0 : i32
    %c0_i32_1 = arith.constant 0 : i32
    return %c0_i32, %c0_i32_0 : i32, i32
  }
  func.func @transform_6(%arg0: i32) -> (i32, i32) {
    %c0_i32 = arith.constant 0 : i32
    %c0_i32_0 = arith.constant 0 : i32
    %c0_i32_1 = arith.constant 0 : i32
    return %c0_i32, %c0_i32_0 : i32, i32
  }
  func.func @transform_7(%arg0: i32) -> (i32, i32) {
    %c0_i32 = arith.constant 0 : i32
    %c0_i32_0 = arith.constant 0 : i32
    %c0_i32_1 = arith.constant 0 : i32
    return %c0_i32, %c0_i32_0 : i32, i32
  }
  func.func @transform_8(%arg0: i32) -> (i32, i32) {
    %c0_i32 = arith.constant 0 : i32
    %c0_i32_0 = arith.constant 0 : i32
    %c0_i32_1 = arith.constant 0 : i32
    return %c0_i32, %c0_i32_0 : i32, i32
  }
  func.func @transform_9(%arg0: i32) -> (i32, i32) {
    %c0_i32 = arith.constant 0 : i32
    %c0_i32_0 = arith.constant 0 : i32
    %c0_i32_1 = arith.constant 0 : i32
    return %c0_i32, %c0_i32_0 : i32, i32
  }
  func.func @transform_10(%arg0: i32) -> (i32, i32) {
    %c0_i32 = arith.constant 0 : i32
    %c0_i32_0 = arith.constant 0 : i32
    %c0_i32_1 = arith.constant 0 : i32
    return %c0_i32, %c0_i32_0 : i32, i32
  }
  func.func @transform_11(%arg0: i32) -> (i32, i32) {
    %c0_i32 = arith.constant 0 : i32
    %c0_i32_0 = arith.constant 0 : i32
    %c0_i32_1 = arith.constant 0 : i32
    return %c0_i32, %c0_i32_0 : i32, i32
  }
  func.func @transform_12(%arg0: i32) -> (i32, i32) {
    %c0_i32 = arith.constant 0 : i32
    %c0_i32_0 = arith.constant 0 : i32
    return %arg0, %c0_i32 : i32, i32
  }
}

</mosaic_0001>

<llo_original>
// kernel: tpu_custom_call.1
$region0: #{tpu_custom_call.1}
  #allocation0 [shape = 'u32[]', space=smem, size = 0x4, offset = 0x4, fixed_abs, tag = 'smem constant byte address 0x4 - core index']
  #allocation1 [shape = 'u32[144,128]{1,0:T(1,128)}', space=vmem, size = 0x12000, scoped, tag = 'internal scratch']
  %s0 = inlined_call_operand.hbm [shape: bf16[2,32], index: 0, kind: input, shape index: {}]
  %s1 = inlined_call_operand.hbm [shape: bf16[2,8,32], index: 1, kind: input, shape index: {}]
  %s2 = inlined_call_operand.vmem [shape: f32[2,8], index: 2, kind: input, shape index: {}]
  %s3 = inlined_call_operand.hbm [shape: bf16[32,32], index: 3, kind: input, shape index: {}]
  %s4 = inlined_call_operand.vmem [shape: f32[1,32], index: 4, kind: input, shape index: {}]
  %s5 = inlined_call_operand.hbm [shape: bf16[32,32], index: 5, kind: input, shape index: {}]
  %s6 = inlined_call_operand.vmem [shape: f32[1,32], index: 6, kind: input, shape index: {}]
  %s7 = inlined_call_operand.hbm [shape: bf16[32,64], index: 7, kind: input, shape index: {}]
  %s8 = inlined_call_operand.hbm [shape: bf16[32,64], index: 8, kind: input, shape index: {}]
  %s9 = inlined_call_operand.vmem [shape: f32[1,64], index: 9, kind: input, shape index: {}]
  %s10 = inlined_call_operand.hbm [shape: bf16[64,128], index: 10, kind: input, shape index: {}]
  %s11 = inlined_call_operand.vmem [shape: f32[1,128], index: 11, kind: input, shape index: {}]
  %s12 = inlined_call_operand.hbm [shape: f32[2,128], index: 12, kind: output, shape index: {}]
  %s13 = sld [smem:[#allocation0]]
  $region86: #{tpu_custom_call.1} parent=0
    _
  %s15 = ssub.s32 1, %s13
  %s16 = scalar_select 0, %s15, %s13
  $region1: #{tpu_custom_call.1} parent=0
    #allocation2 [shape = 'u8[512]{0}', space=vmem, size = 0x400, scoped, tag = 'input window, operand 0, single buffered']
    #allocation3 [shape = 's32[1]{0}', space=sflag, size = 0x4, scoped, tag = 'scoped memory for tpu_custom_call.1']
    #allocation4 [shape = 's32[1]{0}', space=sflag, size = 0x4, scoped, tag = 'scoped memory for tpu_custom_call.1']
    #allocation5 [shape = 'u8[4096]{0}', space=vmem, size = 0x1000, scoped, tag = 'input window, operand 1, single buffered']
    #allocation6 [shape = 's32[1]{0}', space=sflag, size = 0x4, scoped, tag = 'scoped memory for tpu_custom_call.1']
    #allocation7 [shape = 'u8[8192]{0}', space=vmem, size = 0x2000, scoped, tag = 'input window, operand 3, single buffered']
    #allocation8 [shape = 'u8[8192]{0}', space=vmem, size = 0x2000, scoped, tag = 'input window, operand 5, single buffered']
    #allocation9 [shape = 's32[1]{0}', space=sflag, size = 0x4, scoped, tag = 'scoped memory for tpu_custom_call.1']
    #allocation10 [shape = 'u8[8192]{0}', space=vmem, size = 0x2000, scoped, tag = 'input window, operand 7, single buffered']
    #allocation11 [shape = 'u8[8192]{0}', space=vmem, size = 0x2000, scoped, tag = 'input window, operand 8, single buffered']
    #allocation12 [shape = 's32[1]{0}', space=sflag, size = 0x4, scoped, tag = 'scoped memory for tpu_custom_call.1']
    #allocation13 [shape = 'u8[16384]{0}', space=vmem, size = 0x4000, scoped, tag = 'input window, operand 10, single buffered']
    #allocation14 [shape = 'u8[1024]{0}', space=vmem, size = 0x400, scoped, tag = 'output window, operand 0, single buffered']
    %17 = vsyncpa [#allocation3], 0
    %18 = vsyncpa [#allocation6], 0
    %19 = vsyncpa [#allocation9], 0
    %20 = vsyncpa [#allocation12], 0
    %21 = vsyncpa [#allocation4], 0
    // Predicated region
    $region2: #{tpu_custom_call.1} parent=1 // pred_check
      _
    $region3: #{tpu_custom_call.1} parent=1 // pred_check_branch
      %23 = sbr.rel (0) target = $region5
    $region4: #{tpu_custom_call.1} parent=1 // pred_region
      %s25 = ssub.s32 16, 16
      %26 = vsyncadd [#allocation3], %s25
      %s28 = sshll.u32 [#allocation2], 4
      %s29 = int_to_ptr.vmem [resolvable:$true] %s28
      %31 = dma.hbm_to_vmem [thread:$0]  %s0, 16, %s29, [#allocation3]
    $region5: #{tpu_custom_call.1} parent=1 // pred_fallthru
      _
    // Predicated region
    $region6: #{tpu_custom_call.1} parent=1 // pred_check
      _
    $region7: #{tpu_custom_call.1} parent=1 // pred_check_branch
      %33 = sbr.rel (0) target = $region9
    $region8: #{tpu_custom_call.1} parent=1 // pred_region
      %s35 = ssub.s32 128, 128
      %36 = vsyncadd [#allocation6], %s35
      %s37 = sshll.u32 [#allocation5], 4
      %s38 = int_to_ptr.vmem [resolvable:$true] %s37
      %43 = dma.hbm_to_vmem [thread:$0]  %s1, 128, %s38, [#allocation6], 64, 64, 4
    $region9: #{tpu_custom_call.1} parent=1 // pred_fallthru
      _
    // Predicated region
    $region10: #{tpu_custom_call.1} parent=1 // pred_check
      _
    $region11: #{tpu_custom_call.1} parent=1 // pred_check_branch
      %45 = sbr.rel (0) target = $region13
    $region12: #{tpu_custom_call.1} parent=1 // pred_region
      _
    $region13: #{tpu_custom_call.1} parent=1 // pred_fallthru
      _
    // Predicated region
    $region14: #{tpu_custom_call.1} parent=1 // pred_check
      _
    $region15: #{tpu_custom_call.1} parent=1 // pred_check_branch
      %47 = sbr.rel (0) target = $region17
    $region16: #{tpu_custom_call.1} parent=1 // pred_region
      %s49 = ssub.s32 256, 256
      %50 = vsyncadd [#allocation6], %s49
      %s51 = sshll.u32 [#allocation7], 4
      %s52 = int_to_ptr.vmem [resolvable:$true] %s51
      %57 = dma.hbm_to_vmem [thread:$0]  %s3, 256, %s52, [#allocation6], 64, 64, 4
    $region17: #{tpu_custom_call.1} parent=1 // pred_fallthru
      _
    // Predicated region
    $region18: #{tpu_custom_call.1} parent=1 // pred_check
      _
    $region19: #{tpu_custom_call.1} parent=1 // pred_check_branch
      %59 = sbr.rel (0) target = $region21
    $region20: #{tpu_custom_call.1} parent=1 // pred_region
      _
    $region21: #{tpu_custom_call.1} parent=1 // pred_fallthru
      _
    // Predicated region
    $region22: #{tpu_custom_call.1} parent=1 // pred_check
      _
    $region23: #{tpu_custom_call.1} parent=1 // pred_check_branch
      %61 = sbr.rel (0) target = $region25
    $region24: #{tpu_custom_call.1} parent=1 // pred_region
      %s63 = ssub.s32 256, 256
      %64 = vsyncadd [#allocation9], %s63
      %s65 = sshll.u32 [#allocation8], 4
      %s66 = int_to_ptr.vmem [resolvable:$true] %s65
      %71 = dma.hbm_to_vmem [thread:$0]  %s5, 256, %s66, [#allocation9], 64, 64, 4
    $region25: #{tpu_custom_call.1} parent=1 // pred_fallthru
      _
    // Predicated region
    $region26: #{tpu_custom_call.1} parent=1 // pred_check
      _
    $region27: #{tpu_custom_call.1} parent=1 // pred_check_branch
      %73 = sbr.rel (0) target = $region29
    $region28: #{tpu_custom_call.1} parent=1 // pred_region
      _
    $region29: #{tpu_custom_call.1} parent=1 // pred_fallthru
      _
    // Predicated region
    $region30: #{tpu_custom_call.1} parent=1 // pred_check
      _
    $region31: #{tpu_custom_call.1} parent=1 // pred_check_branch
      %75 = sbr.rel (0) target = $region33
    $region32: #{tpu_custom_call.1} parent=1 // pred_region
      %s77 = ssub.s32 256, 256
      %78 = vsyncadd [#allocation9], %s77
      %s79 = sshll.u32 [#allocation10], 4
      %s80 = int_to_ptr.vmem [resolvable:$true] %s79
      %85 = dma.hbm_to_vmem [thread:$0]  %s7, 256, %s80, [#allocation9], 64, 64, 4
    $region33: #{tpu_custom_call.1} parent=1 // pred_fallthru
      _
    // Predicated region
    $region34: #{tpu_custom_call.1} parent=1 // pred_check
      _
    $region35: #{tpu_custom_call.1} parent=1 // pred_check_branch
      %87 = sbr.rel (0) target = $region37
    $region36: #{tpu_custom_call.1} parent=1 // pred_region
      %s89 = ssub.s32 256, 256
      %90 = vsyncadd [#allocation12], %s89
      %s91 = sshll.u32 [#allocation11], 4
      %s92 = int_to_ptr.vmem [resolvable:$true] %s91
      %97 = dma.hbm_to_vmem [thread:$0]  %s8, 256, %s92, [#allocation12], 64, 64, 4
    $region37: #{tpu_custom_call.1} parent=1 // pred_fallthru
      _
    // Predicated region
    $region38: #{tpu_custom_call.1} parent=1 // pred_check
      _
    $region39: #{tpu_custom_call.1} parent=1 // pred_check_branch
      %99 = sbr.rel (0) target = $region41
    $region40: #{tpu_custom_call.1} parent=1 // pred_region
      _
    $region41: #{tpu_custom_call.1} parent=1 // pred_fallthru
      _
    // Predicated region
    $region42: #{tpu_custom_call.1} parent=1 // pred_check
      _
    $region43: #{tpu_custom_call.1} parent=1 // pred_check_branch
      %101 = sbr.rel (0) target = $region45
    $region44: #{tpu_custom_call.1} parent=1 // pred_region
      %s103 = ssub.s32 512, 512
      %104 = vsyncadd [#allocation12], %s103
      %s105 = sshll.u32 [#allocation13], 4
      %s106 = int_to_ptr.vmem [resolvable:$true] %s105
      %111 = dma.hbm_to_vmem [thread:$0]  %s10, 512, %s106, [#allocation12], 64, 64, 4
    $region45: #{tpu_custom_call.1} parent=1 // pred_fallthru
      _
    // Predicated region
    $region46: #{tpu_custom_call.1} parent=1 // pred_check
      _
    $region47: #{tpu_custom_call.1} parent=1 // pred_check_branch
      %113 = sbr.rel (0) target = $region49
    $region48: #{tpu_custom_call.1} parent=1 // pred_region
      _
    $region49: #{tpu_custom_call.1} parent=1 // pred_fallthru
      _
    // Predicated region
    $region50: #{tpu_custom_call.1} parent=1 // pred_check
      _
    $region51: #{tpu_custom_call.1} parent=1 // pred_check_branch
      %115 = sbr.rel (0) target = $region53
    $region52: #{tpu_custom_call.1} parent=1 // pred_region
      %116 = dma.done [#allocation3], 16
    $region53: #{tpu_custom_call.1} parent=1 // pred_fallthru
      _
    // Predicated region
    $region54: #{tpu_custom_call.1} parent=1 // pred_check
      _
    $region55: #{tpu_custom_call.1} parent=1 // pred_check_branch
      %118 = sbr.rel (0) target = $region57
    $region56: #{tpu_custom_call.1} parent=1 // pred_region
      %119 = dma.done [#allocation6], 128
    $region57: #{tpu_custom_call.1} parent=1 // pred_fallthru
      _
    // Predicated region
    $region58: #{tpu_custom_call.1} parent=1 // pred_check
      _
    $region59: #{tpu_custom_call.1} parent=1 // pred_check_branch
      %121 = sbr.rel (0) target = $region61
    $region60: #{tpu_custom_call.1} parent=1 // pred_region
      %122 = dma.done [#allocation6], 256
    $region61: #{tpu_custom_call.1} parent=1 // pred_fallthru
      _
    // Predicated region
    $region62: #{tpu_custom_call.1} parent=1 // pred_check
      _
    $region63: #{tpu_custom_call.1} parent=1 // pred_check_branch
      %124 = sbr.rel (0) target = $region65
    $region64: #{tpu_custom_call.1} parent=1 // pred_region
      %125 = dma.done [#allocation9], 256
    $region65: #{tpu_custom_call.1} parent=1 // pred_fallthru
      _
    // Predicated region
    $region66: #{tpu_custom_call.1} parent=1 // pred_check
      _
    $region67: #{tpu_custom_call.1} parent=1 // pred_check_branch
      %127 = sbr.rel (0) target = $region69
    $region68: #{tpu_custom_call.1} parent=1 // pred_region
      %128 = dma.done [#allocation9], 256
    $region69: #{tpu_custom_call.1} parent=1 // pred_fallthru
      _
    // Predicated region
    $region70: #{tpu_custom_call.1} parent=1 // pred_check
      _
    $region71: #{tpu_custom_call.1} parent=1 // pred_check_branch
      %130 = sbr.rel (0) target = $region73
    $region72: #{tpu_custom_call.1} parent=1 // pred_region
      %131 = dma.done [#allocation12], 256
    $region73: #{tpu_custom_call.1} parent=1 // pred_fallthru
      _
    // Predicated region
    $region74: #{tpu_custom_call.1} parent=1 // pred_check
      _
    $region75: #{tpu_custom_call.1} parent=1 // pred_check_branch
      %133 = sbr.rel (0) target = $region77
    $region76: #{tpu_custom_call.1} parent=1 // pred_region
      %134 = dma.done [#allocation12], 512
    $region77: #{tpu_custom_call.1} parent=1 // pred_fallthru
      _
    %v136 = vld [vmem:[#allocation2] sm:$0x1]
    %v137 = vld [vmem:[#allocation7] sm:$0xf]
    %v138 = vld [vmem:[#allocation7 + $0x4] sm:$0xf]
    %v139 = vld [vmem:[#allocation7 + $0x8] sm:$0xf]
    %v140 = vld [vmem:[#allocation7 + $0xc] sm:$0xf]
    %v141 = vld [vmem:[%s4] sm:$0x1]
    %v143 = vlaneseq
    %v144 = vshrl.u32 %v143, 7
    %v145 = vsub.s32 0, %v144
    %v146 = vrot.slane %v141, %v145
    %v152 = vunpack.c.l.b16 %v137
    %v153 = vunpack.c.l.b16 %v138
    %v154 = vunpack.c.l.b16 %v139
    %v155 = vunpack.c.l.b16 %v140
    %v156 = vpack.c.b16 %v153, %v152
    %v157 = vpack.c.b16 %v155, %v154
    %vm160 = vcmask 261120
    %v162 = vsel %vm160, %v136, 0
    %164 = vmatprep.subr.bf16.mxu0 0
    %165 = vmatpush1.bf16.msra.mxu0 0
    %166 = vmatprep.subr.bf16.mxu0 0
    %167 = vmatpush1.bf16.msra.mxu0 0
    %168 = vmatprep.subr.bf16.mxu0 0
    %169 = vmatpush1.bf16.msra.mxu0 0
    %170 = vmatprep.subr.bf16.mxu0 0
    %171 = vmatpush1.bf16.msra.mxu0 0
    %172 = vmatprep.subr.bf16.mxu0 0
    %173 = vmatpush1.bf16.msra.mxu0 0
    %174 = vmatprep.subr.bf16.mxu0 0
    %175 = vmatpush1.bf16.msra.mxu0 0
    %176 = vmatprep.subr.bf16.mxu0 0
    %177 = vmatpush1.bf16.msra.mxu0 %v157
    %178 = vmatprep.subr.bf16.mxu0 0
    %179 = vmatpush1.bf16.msra.mxu0 %v156
    %180 = vmatprep.subr.bf16.mxu0 0
    %181 = vmatpush2.bf16.msra.mxu0 0
    %182 = vmatprep.subr.bf16.mxu0 0
    %183 = vmatpush2.bf16.msra.mxu0 0
    %184 = vmatprep.subr.bf16.mxu0 0
    %185 = vmatpush2.bf16.msra.mxu0 0
    %186 = vmatprep.subr.bf16.mxu0 0
    %187 = vmatpush2.bf16.msra.mxu0 0
    %188 = vmatprep.subr.bf16.mxu0 0
    %189 = vmatpush2.bf16.msra.mxu0 0
    %190 = vmatprep.subr.bf16.mxu0 0
    %191 = vmatpush2.bf16.msra.mxu0 0
    %192 = vmatprep.subr.bf16.mxu0 0
    %193 = vmatpush2.bf16.msra.mxu0 0
    %194 = vmatprep.subr.bf16.mxu0 0
    %195 = vmatpush2.bf16.msra.mxu0 0
    %196 = vmatprep.mubr.bf16.mxu0 0
    %197 = vmatmul.mubr.bf16.gmra.mxu0 %v162
    %v198 = vpop.f32.mrf.mxu0
    %v199 = vadd.f32 %v146, %v198
    %v200 = vpop.f32.mrf.mxu0
    %v201 = vpop.f32.mrf.mxu0
    %v202 = vpop.f32.mrf.mxu0
    %203 = vdwg.mxu0
    %v204 = vtanh.pop %v199
    %v205 = vld [vmem:[#allocation5] sm:$0xf]
    %v206 = vld [vmem:[#allocation5 + $0x4] sm:$0xf]
    %v207 = vld [vmem:[#allocation8] sm:$0xf]
    %v208 = vld [vmem:[#allocation8 + $0x4] sm:$0xf]
    %v209 = vld [vmem:[#allocation8 + $0x8] sm:$0xf]
    %v210 = vld [vmem:[#allocation8 + $0xc] sm:$0xf]
    %v211 = vld [vmem:[%s6] sm:$0x1]
    %v213 = vlaneseq
    %v214 = vshrl.u32 %v213, 7
    %v215 = vsub.s32 0, %v214
    %v216 = vrot.slane %v211, %v215
    %v220 = vunpack.c.l.b16 %v205
    %v221 = vunpack.c.l.b16 %v206
    %v222 = vpack.c.b16 %v221, %v220
    %v227 = vunpack.c.l.b16 %v207
    %v228 = vunpack.c.l.b16 %v208
    %v229 = vunpack.c.l.b16 %v209
    %v230 = vunpack.c.l.b16 %v210
    %v231 = vpack.c.b16 %v228, %v227
    %v232 = vpack.c.b16 %v230, %v229
    %v236 = vsel %vm160, %v222, 0
    %238 = vmatprep.subr.bf16.mxu0 0
    %239 = vmatpush1.bf16.msra.mxu0 0
    %240 = vmatprep.subr.bf16.mxu0 0
    %241 = vmatpush1.bf16.msra.mxu0 0
    %242 = vmatprep.subr.bf16.mxu0 0
    %243 = vmatpush1.bf16.msra.mxu0 0
    %244 = vmatprep.subr.bf16.mxu0 0
    %245 = vmatpush1.bf16.msra.mxu0 0
    %246 = vmatprep.subr.bf16.mxu0 0
    %247 = vmatpush1.bf16.msra.mxu0 0
    %248 = vmatprep.subr.bf16.mxu0 0
    %249 = vmatpush1.bf16.msra.mxu0 0
    %250 = vmatprep.subr.bf16.mxu0 0
    %251 = vmatpush1.bf16.msra.mxu0 %v232
    %252 = vmatprep.subr.bf16.mxu0 0
    %253 = vmatpush1.bf16.msra.mxu0 %v231
    %254 = vmatprep.subr.bf16.mxu0 0
    %255 = vmatpush2.bf16.msra.mxu0 0
    %256 = vmatprep.subr.bf16.mxu0 0
    %257 = vmatpush2.bf16.msra.mxu0 0
    %258 = vmatprep.subr.bf16.mxu0 0
    %259 = vmatpush2.bf16.msra.mxu0 0
    %260 = vmatprep.subr.bf16.mxu0 0
    %261 = vmatpush2.bf16.msra.mxu0 0
    %262 = vmatprep.subr.bf16.mxu0 0
    %263 = vmatpush2.bf16.msra.mxu0 0
    %264 = vmatprep.subr.bf16.mxu0 0
    %265 = vmatpush2.bf16.msra.mxu0 0
    %266 = vmatprep.subr.bf16.mxu0 0
    %267 = vmatpush2.bf16.msra.mxu0 0
    %268 = vmatprep.subr.bf16.mxu0 0
    %269 = vmatpush2.bf16.msra.mxu0 0
    %270 = vmatprep.mubr.bf16.mxu0 0
    %271 = vmatmul.mubr.bf16.gmra.mxu0 %v236
    %v272 = vpop.f32.mrf.mxu0
    %v273 = vadd.f32 %v216, %v272
    %v274 = vpop.f32.mrf.mxu0
    %v275 = vpop.f32.mrf.mxu0
    %v276 = vadd.f32 %v216, %v275
    %v277 = vpop.f32.mrf.mxu0
    %278 = vdwg.mxu0
    %v279 = vtanh.pop %v273
    %v280 = vtanh.pop %v276
    %v281 = vpack.c.bf16 %v204, %v204
    %v282 = vpack.c.bf16 %v279, %v279
    %v283 = vpack.c.bf16 %v280, %v280
    %v286 = vunpack.c.l.s4 1966171168
    %v287 = vunpack.c.0.s8 %v286
    %v288 = vlaneseq
    %v289 = vshrl.u32 %v288, 7
    %v290 = vsub.s32 %v287, %v289
    %v291 = vrot.slane %v281, %v290
    %v293 = vunpack.c.l.s4 1966171168
    %v294 = vunpack.c.0.s8 %v293
    %v295 = vlaneseq
    %v296 = vshrl.u32 %v295, 7
    %v297 = vsub.s32 %v294, %v296
    %v298 = vrot.slane %v291, %v297
    %v299 = vunpack.i.l.s16 %v298
    %v300 = vunpack.i.h.s16 %v298
    %v301 = vpack.i.b16 %v299, %v299
    %v302 = vlaneseq
    %v303 = vshrl.u32 %v302, 7
    %v304 = vsub.s32 0, %v303
    %v305 = vrot.slane %v301, %v304
    %v307 = vsel %vm160, %v305, 0
    %v310 = vsel %vm160, %v282, 0
    %312 = vmatprep.subr.bf16.mxu0 0
    %313 = vmatpush1.bf16.xpose.msra.mxu0 0
    %314 = vmatprep.subr.bf16.mxu0 0
    %315 = vmatpush1.bf16.xpose.msra.mxu0 0
    %316 = vmatprep.subr.bf16.mxu0 0
    %317 = vmatpush1.bf16.xpose.msra.mxu0 0
    %318 = vmatprep.subr.bf16.mxu0 0
    %319 = vmatpush1.bf16.xpose.msra.mxu0 0
    %320 = vmatprep.subr.bf16.mxu0 0
    %321 = vmatpush1.bf16.xpose.msra.mxu0 0
    %322 = vmatprep.subr.bf16.mxu0 0
    %323 = vmatpush1.bf16.xpose.msra.mxu0 0
    %324 = vmatprep.subr.bf16.mxu0 0
    %325 = vmatpush1.bf16.xpose.msra.mxu0 0
    %326 = vmatprep.subr.bf16.mxu0 0
    %327 = vmatpush1.bf16.xpose.msra.mxu0 %v310
    %328 = vmatprep.subr.bf16.mxu0 0
    %329 = vmatpush2.bf16.xpose.msra.mxu0 0
    %330 = vmatprep.subr.bf16.mxu0 0
    %331 = vmatpush2.bf16.xpose.msra.mxu0 0
    %332 = vmatprep.subr.bf16.mxu0 0
    %333 = vmatpush2.bf16.xpose.msra.mxu0 0
    %334 = vmatprep.subr.bf16.mxu0 0
    %335 = vmatpush2.bf16.xpose.msra.mxu0 0
    %336 = vmatprep.subr.bf16.mxu0 0
    %337 = vmatpush2.bf16.xpose.msra.mxu0 0
    %338 = vmatprep.subr.bf16.mxu0 0
    %339 = vmatpush2.bf16.xpose.msra.mxu0 0
    %340 = vmatprep.subr.bf16.mxu0 0
    %341 = vmatpush2.bf16.xpose.msra.mxu0 0
    %342 = vmatprep.subr.bf16.mxu0 0
    %343 = vmatpush2.bf16.xpose.msra.mxu0 0
    %344 = vmatprep.mubr.bf16.mxu0 0
    %345 = vmatmul.mubr.bf16.gmra.mxu0 %v307
    %v346 = vpop.f32.mrf.mxu0
    %v347 = vadd.f32 0.0, %v346
    %v348 = vpop.f32.mrf.mxu0
    %v349 = vpop.f32.mrf.mxu0
    %v350 = vpop.f32.mrf.mxu0
    %351 = vdwg.mxu0
    %v352 = vpack.i.b16 %v300, %v300
    %v353 = vlaneseq
    %v354 = vshrl.u32 %v353, 7
    %v355 = vsub.s32 0, %v354
    %v356 = vrot.slane %v352, %v355
    %v358 = vsel %vm160, %v356, 0
    %v361 = vsel %vm160, %v283, 0
    %363 = vmatprep.subr.bf16.mxu0 0
    %364 = vmatpush1.bf16.xpose.msra.mxu0 0
    %365 = vmatprep.subr.bf16.mxu0 0
    %366 = vmatpush1.bf16.xpose.msra.mxu0 0
    %367 = vmatprep.subr.bf16.mxu0 0
    %368 = vmatpush1.bf16.xpose.msra.mxu0 0
    %369 = vmatprep.subr.bf16.mxu0 0
    %370 = vmatpush1.bf16.xpose.msra.mxu0 0
    %371 = vmatprep.subr.bf16.mxu0 0
    %372 = vmatpush1.bf16.xpose.msra.mxu0 0
    %373 = vmatprep.subr.bf16.mxu0 0
    %374 = vmatpush1.bf16.xpose.msra.mxu0 0
    %375 = vmatprep.subr.bf16.mxu0 0
    %376 = vmatpush1.bf16.xpose.msra.mxu0 0
    %377 = vmatprep.subr.bf16.mxu0 0
    %378 = vmatpush1.bf16.xpose.msra.mxu0 %v361
    %379 = vmatprep.subr.bf16.mxu0 0
    %380 = vmatpush2.bf16.xpose.msra.mxu0 0
    %381 = vmatprep.subr.bf16.mxu0 0
    %382 = vmatpush2.bf16.xpose.msra.mxu0 0
    %383 = vmatprep.subr.bf16.mxu0 0
    %384 = vmatpush2.bf16.xpose.msra.mxu0 0
    %385 = vmatprep.subr.bf16.mxu0 0
    %386 = vmatpush2.bf16.xpose.msra.mxu0 0
    %387 = vmatprep.subr.bf16.mxu0 0
    %388 = vmatpush2.bf16.xpose.msra.mxu0 0
    %389 = vmatprep.subr.bf16.mxu0 0
    %390 = vmatpush2.bf16.xpose.msra.mxu0 0
    %391 = vmatprep.subr.bf16.mxu0 0
    %392 = vmatpush2.bf16.xpose.msra.mxu0 0
    %393 = vmatprep.subr.bf16.mxu0 0
    %394 = vmatpush2.bf16.xpose.msra.mxu0 0
    %395 = vmatprep.mubr.bf16.mxu0 0
    %396 = vmatmul.mubr.bf16.gmra.mxu0 %v358
    %v397 = vpop.f32.mrf.mxu0
    %v398 = vadd.f32 0.0, %v397
    %v399 = vpop.f32.mrf.mxu0
    %v400 = vpop.f32.mrf.mxu0
    %v401 = vpop.f32.mrf.mxu0
    %402 = vdwg.mxu0
    %v403 = vmul.f32 %v347, 0.17677669
    %v404 = vmul.f32 %v398, 0.17677669
    %v405 = vld [vmem:[%s2] sm:$0x3]
    %v408 = vunpack.c.l.s4 1966171168
    %v409 = vunpack.c.0.s8 %v408
    %v410 = vlaneseq
    %v411 = vshrl.u32 %v410, 7
    %v412 = vsub.s32 %v409, %v411
    %v413 = vrot.slane %v405, %v412
    %v414 = vcombine.high %v413, %v413
    %v416 = vunpack.c.l.s4 1966171168
    %v417 = vunpack.c.0.s8 %v416
    %v418 = vlaneseq
    %v419 = vshrl.u32 %v418, 7
    %v420 = vsub.s32 %v417, %v419
    %v421 = vrot.slane %v413, %v420
    %v423 = vunpack.c.l.s4 1966171168
    %v424 = vunpack.c.0.s8 %v423
    %v425 = vlaneseq
    %v426 = vshrl.u32 %v425, 7
    %v427 = vsub.s32 %v424, %v426
    %v428 = vrot.slane %v414, %v427
    %vm431 = vcmp.gt.f32.partialorder %v421, 0.0
    %vm432 = vcmp.gt.f32.partialorder %v428, 0.0
    %v433 = vsel %vm431, %v403, -1e+09
    %v434 = vsel %vm432, %v404, -1e+09
    %vm435 = vcmask 57344
    %v436 = vsel %vm435, %v433, -inf
    %437 = vmax.xlane.f32.xlu0 %v436
    %v438 = vpop.xlane.xlu0 %437
    %v439 = vsel %vm435, %v434, -inf
    %440 = vmax.xlane.f32.xlu0 %v439
    %v441 = vpop.xlane.xlu0 %440
    %v442 = vsub.f32 %v433, %v438
    %v443 = vsub.f32 %v434, %v441
    %v444 = vmul.f32 %v442, 1.442695
    %v445 = vpow.pop %v444
    %v446 = vmul.f32 %v443, 1.442695
    %v447 = vpow.pop %v446
    %v448 = vsel %vm435, %v445, 0.0
    %449 = vadd.xlane.f32.xlu0 %v448
    %v450 = vpop.xlane.xlu0 %449
    %v451 = vsel %vm435, %v447, 0.0
    %452 = vadd.xlane.f32.xlu0 %v451
    %v453 = vpop.xlane.xlu0 %452
    %v454 = vrcp.pop %v450
    %v455 = vrcp.pop %v453
    %v456 = vmul.f32 %v445, %v454
    %v457 = vmul.f32 %v447, %v455
    %v458 = vpack.c.bf16 %v456, %v456
    %v459 = vpack.c.bf16 %v457, %v457
    %vm460 = vcmask 64512
    %v462 = vsel %vm460, %v458, 0
    %vm464 = vcmask 1043456
    %v465 = vsel %vm464, %v282, 0
    %467 = vmatprep.subr.bf16.mxu0 0
    %468 = vmatpush1.bf16.msra.mxu0 0
    %469 = vmatprep.subr.bf16.mxu0 0
    %470 = vmatpush1.bf16.msra.mxu0 0
    %471 = vmatprep.subr.bf16.mxu0 0
    %472 = vmatpush1.bf16.msra.mxu0 0
    %473 = vmatprep.subr.bf16.mxu0 0
    %474 = vmatpush1.bf16.msra.mxu0 0
    %475 = vmatprep.subr.bf16.mxu0 0
    %476 = vmatpush1.bf16.msra.mxu0 0
    %477 = vmatprep.subr.bf16.mxu0 0
    %478 = vmatpush1.bf16.msra.mxu0 0
    %479 = vmatprep.subr.bf16.mxu0 0
    %480 = vmatpush1.bf16.msra.mxu0 0
    %481 = vmatprep.subr.bf16.mxu0 0
    %482 = vmatpush1.bf16.msra.mxu0 %v465
    %483 = vmatprep.subr.bf16.mxu0 0
    %484 = vmatpush2.bf16.msra.mxu0 0
    %485 = vmatprep.subr.bf16.mxu0 0
    %486 = vmatpush2.bf16.msra.mxu0 0
    %487 = vmatprep.subr.bf16.mxu0 0
    %488 = vmatpush2.bf16.msra.mxu0 0
    %489 = vmatprep.subr.bf16.mxu0 0
    %490 = vmatpush2.bf16.msra.mxu0 0
    %491 = vmatprep.subr.bf16.mxu0 0
    %492 = vmatpush2.bf16.msra.mxu0 0
    %493 = vmatprep.subr.bf16.mxu0 0
    %494 = vmatpush2.bf16.msra.mxu0 0
    %495 = vmatprep.subr.bf16.mxu0 0
    %496 = vmatpush2.bf16.msra.mxu0 0
    %497 = vmatprep.subr.bf16.mxu0 0
    %498 = vmatpush2.bf16.msra.mxu0 0
    %499 = vmatprep.mubr.bf16.mxu0 0
    %500 = vmatmul.mubr.bf16.gmra.mxu0 %v462
    %v501 = vpop.f32.mrf.mxu0
    %v502 = vadd.f32 0.0, %v501
    %v503 = vpop.f32.mrf.mxu0
    %v504 = vpop.f32.mrf.mxu0
    %v505 = vpop.f32.mrf.mxu0
    %506 = vdwg.mxu0
    %v508 = vsel %vm460, %v459, 0
    %v510 = vsel %vm464, %v283, 0
    %512 = vmatprep.subr.bf16.mxu0 0
    %513 = vmatpush1.bf16.msra.mxu0 0
    %514 = vmatprep.subr.bf16.mxu0 0
    %515 = vmatpush1.bf16.msra.mxu0 0
    %516 = vmatprep.subr.bf16.mxu0 0
    %517 = vmatpush1.bf16.msra.mxu0 0
    %518 = vmatprep.subr.bf16.mxu0 0
    %519 = vmatpush1.bf16.msra.mxu0 0
    %520 = vmatprep.subr.bf16.mxu0 0
    %521 = vmatpush1.bf16.msra.mxu0 0
    %522 = vmatprep.subr.bf16.mxu0 0
    %523 = vmatpush1.bf16.msra.mxu0 0
    %524 = vmatprep.subr.bf16.mxu0 0
    %525 = vmatpush1.bf16.msra.mxu0 0
    %526 = vmatprep.subr.bf16.mxu0 0
    %527 = vmatpush1.bf16.msra.mxu0 %v510
    %528 = vmatprep.subr.bf16.mxu0 0
    %529 = vmatpush2.bf16.msra.mxu0 0
    %530 = vmatprep.subr.bf16.mxu0 0
    %531 = vmatpush2.bf16.msra.mxu0 0
    %532 = vmatprep.subr.bf16.mxu0 0
    %533 = vmatpush2.bf16.msra.mxu0 0
    %534 = vmatprep.subr.bf16.mxu0 0
    %535 = vmatpush2.bf16.msra.mxu0 0
    %536 = vmatprep.subr.bf16.mxu0 0
    %537 = vmatpush2.bf16.msra.mxu0 0
    %538 = vmatprep.subr.bf16.mxu0 0
    %539 = vmatpush2.bf16.msra.mxu0 0
    %540 = vmatprep.subr.bf16.mxu0 0
    %541 = vmatpush2.bf16.msra.mxu0 0
    %542 = vmatprep.subr.bf16.mxu0 0
    %543 = vmatpush2.bf16.msra.mxu0 0
    %544 = vmatprep.mubr.bf16.mxu0 0
    %545 = vmatmul.mubr.bf16.gmra.mxu0 %v508
    %v546 = vpop.f32.mrf.mxu0
    %v547 = vadd.f32 0.0, %v546
    %v548 = vpop.f32.mrf.mxu0
    %v549 = vpop.f32.mrf.mxu0
    %v550 = vpop.f32.mrf.mxu0
    %551 = vdwg.mxu0
    %v552 = vld [vmem:[#allocation10] sm:$0xf]
    %v553 = vld [vmem:[#allocation10 + $0x4] sm:$0xf]
    %v554 = vld [vmem:[#allocation10 + $0x8] sm:$0xf]
    %v555 = vld [vmem:[#allocation10 + $0xc] sm:$0xf]
    %v556 = vpack.c.bf16 %v502, %v502
    %v557 = vpack.c.bf16 %v547, %v547
    %v558 = vld [vmem:[#allocation11] sm:$0xf]
    %v559 = vld [vmem:[#allocation11 + $0x4] sm:$0xf]
    %v560 = vld [vmem:[#allocation11 + $0x8] sm:$0xf]
    %v561 = vld [vmem:[#allocation11 + $0xc] sm:$0xf]
    %v564 = vunpack.c.l.b16 %v556
    %v565 = vunpack.c.l.b16 %v557
    %v566 = vrot.slane %v565, 7
    %vm567 = vcmask 1041409
    %v568 = vsel %vm567, %v566, %v564
    %v569 = vpack.c.b16 %v568, %v568
    %v574 = vunpack.c.l.b16 %v558
    %v575 = vunpack.c.l.b16 %v559
    %v576 = vunpack.c.l.b16 %v560
    %v577 = vunpack.c.l.b16 %v561
    %v578 = vpack.c.b16 %v575, %v574
    %v579 = vpack.c.b16 %v577, %v576
    %v583 = vsel %vm160, %v569, 0
    %585 = vmatprep.subr.bf16.mxu0 0
    %586 = vmatpush1.bf16.msra.mxu0 0
    %587 = vmatprep.subr.bf16.mxu0 0
    %588 = vmatpush1.bf16.msra.mxu0 0
    %589 = vmatprep.subr.bf16.mxu0 0
    %590 = vmatpush1.bf16.msra.mxu0 0
    %591 = vmatprep.subr.bf16.mxu0 0
    %592 = vmatpush1.bf16.msra.mxu0 0
    %593 = vmatprep.subr.bf16.mxu0 0
    %594 = vmatpush1.bf16.msra.mxu0 0
    %595 = vmatprep.subr.bf16.mxu0 0
    %596 = vmatpush1.bf16.msra.mxu0 0
    %597 = vmatprep.subr.bf16.mxu0 0
    %598 = vmatpush1.bf16.msra.mxu0 %v579
    %599 = vmatprep.subr.bf16.mxu0 0
    %600 = vmatpush1.bf16.msra.mxu0 %v578
    %601 = vmatprep.subr.bf16.mxu0 0
    %602 = vmatpush2.bf16.msra.mxu0 0
    %603 = vmatprep.subr.bf16.mxu0 0
    %604 = vmatpush2.bf16.msra.mxu0 0
    %605 = vmatprep.subr.bf16.mxu0 0
    %606 = vmatpush2.bf16.msra.mxu0 0
    %607 = vmatprep.subr.bf16.mxu0 0
    %608 = vmatpush2.bf16.msra.mxu0 0
    %609 = vmatprep.subr.bf16.mxu0 0
    %610 = vmatpush2.bf16.msra.mxu0 0
    %611 = vmatprep.subr.bf16.mxu0 0
    %612 = vmatpush2.bf16.msra.mxu0 0
    %613 = vmatprep.subr.bf16.mxu0 0
    %614 = vmatpush2.bf16.msra.mxu0 0
    %615 = vmatprep.subr.bf16.mxu0 0
    %616 = vmatpush2.bf16.msra.mxu0 0
    %617 = vmatprep.mubr.bf16.mxu0 0
    %618 = vmatmul.mubr.bf16.gmra.mxu0 %v583
    %v619 = vpop.f32.mrf.mxu0
    %v620 = vadd.f32 0.0, %v619
    %v621 = vpop.f32.mrf.mxu0
    %v622 = vpop.f32.mrf.mxu0
    %v623 = vpop.f32.mrf.mxu0
    %624 = vdwg.mxu0
    %v629 = vunpack.c.l.b16 %v552
    %v630 = vunpack.c.l.b16 %v553
    %v631 = vunpack.c.l.b16 %v554
    %v632 = vunpack.c.l.b16 %v555
    %v633 = vpack.c.b16 %v630, %v629
    %v634 = vpack.c.b16 %v632, %v631
    %v638 = vsel %vm160, %v281, 0
    %640 = vmatprep.subr.bf16.mxu0 0
    %641 = vmatpush1.bf16.msra.mxu0 0
    %642 = vmatprep.subr.bf16.mxu0 0
    %643 = vmatpush1.bf16.msra.mxu0 0
    %644 = vmatprep.subr.bf16.mxu0 0
    %645 = vmatpush1.bf16.msra.mxu0 0
    %646 = vmatprep.subr.bf16.mxu0 0
    %647 = vmatpush1.bf16.msra.mxu0 0
    %648 = vmatprep.subr.bf16.mxu0 0
    %649 = vmatpush1.bf16.msra.mxu0 0
    %650 = vmatprep.subr.bf16.mxu0 0
    %651 = vmatpush1.bf16.msra.mxu0 0
    %652 = vmatprep.subr.bf16.mxu0 0
    %653 = vmatpush1.bf16.msra.mxu0 %v634
    %654 = vmatprep.subr.bf16.mxu0 0
    %655 = vmatpush1.bf16.msra.mxu0 %v633
    %656 = vmatprep.subr.bf16.mxu0 0
    %657 = vmatpush2.bf16.msra.mxu0 0
    %658 = vmatprep.subr.bf16.mxu0 0
    %659 = vmatpush2.bf16.msra.mxu0 0
    %660 = vmatprep.subr.bf16.mxu0 0
    %661 = vmatpush2.bf16.msra.mxu0 0
    %662 = vmatprep.subr.bf16.mxu0 0
    %663 = vmatpush2.bf16.msra.mxu0 0
    %664 = vmatprep.subr.bf16.mxu0 0
    %665 = vmatpush2.bf16.msra.mxu0 0
    %666 = vmatprep.subr.bf16.mxu0 0
    %667 = vmatpush2.bf16.msra.mxu0 0
    %668 = vmatprep.subr.bf16.mxu0 0
    %669 = vmatpush2.bf16.msra.mxu0 0
    %670 = vmatprep.subr.bf16.mxu0 0
    %671 = vmatpush2.bf16.msra.mxu0 0
    %672 = vmatprep.mubr.bf16.mxu0 0
    %673 = vmatmul.mubr.bf16.gmra.mxu0 %v638
    %v674 = vpop.f32.mrf.mxu0
    %v675 = vadd.f32 %v620, %v674
    %v676 = vpop.f32.mrf.mxu0
    %v677 = vpop.f32.mrf.mxu0
    %v678 = vpop.f32.mrf.mxu0
    %679 = vdwg.mxu0
    %v680 = vld [vmem:[%s9] sm:$0x1]
    %v682 = vlaneseq
    %v683 = vshrl.u32 %v682, 7
    %v684 = vsub.s32 0, %v683
    %v685 = vrot.slane %v680, %v684
    %v687 = vadd.f32 %v675, %v685
    %v688 = vtanh.pop %v687
    %v689 = vpack.c.bf16 %v688, %v688
    %v690 = vld [vmem:[#allocation13] sm:$0xf]
    %v691 = vld [vmem:[#allocation13 + $0x4] sm:$0xf]
    %v692 = vld [vmem:[#allocation13 + $0x8] sm:$0xf]
    %v693 = vld [vmem:[#allocation13 + $0xc] sm:$0xf]
    %v694 = vld [vmem:[#allocation13 + $0x10] sm:$0xf]
    %v695 = vld [vmem:[#allocation13 + $0x14] sm:$0xf]
    %v696 = vld [vmem:[#allocation13 + $0x18] sm:$0xf]
    %v697 = vld [vmem:[#allocation13 + $0x1c] sm:$0xf]
    %v698 = vld [vmem:[%s11] sm:$0x1]
    %v700 = vlaneseq
    %v701 = vshrl.u32 %v700, 7
    %v702 = vsub.s32 0, %v701
    %v703 = vrot.slane %v698, %v702
    %v713 = vunpack.c.l.b16 %v690
    %v714 = vunpack.c.l.b16 %v691
    %v715 = vunpack.c.l.b16 %v692
    %v716 = vunpack.c.l.b16 %v693
    %v717 = vunpack.c.l.b16 %v694
    %v718 = vunpack.c.l.b16 %v695
    %v719 = vunpack.c.l.b16 %v696
    %v720 = vunpack.c.l.b16 %v697
    %v721 = vpack.c.b16 %v714, %v713
    %v722 = vpack.c.b16 %v716, %v715
    %v723 = vpack.c.b16 %v718, %v717
    %v724 = vpack.c.b16 %v720, %v719
    %vm729 = vcmask 523264
    %v731 = vsel %vm729, %v689, 0
    %733 = vmatprep.subr.bf16.mxu0 0
    %734 = vmatpush1.bf16.msra.mxu0 0
    %735 = vmatprep.subr.bf16.mxu0 0
    %736 = vmatpush1.bf16.msra.mxu0 0
    %737 = vmatprep.subr.bf16.mxu0 0
    %738 = vmatpush1.bf16.msra.mxu0 0
    %739 = vmatprep.subr.bf16.mxu0 0
    %740 = vmatpush1.bf16.msra.mxu0 0
    %741 = vmatprep.subr.bf16.mxu0 0
    %742 = vmatpush1.bf16.msra.mxu0 %v724
    %743 = vmatprep.subr.bf16.mxu0 0
    %744 = vmatpush1.bf16.msra.mxu0 %v723
    %745 = vmatprep.subr.bf16.mxu0 0
    %746 = vmatpush1.bf16.msra.mxu0 %v722
    %747 = vmatprep.subr.bf16.mxu0 0
    %748 = vmatpush1.bf16.msra.mxu0 %v721
    %749 = vmatprep.subr.bf16.mxu0 0
    %750 = vmatpush2.bf16.msra.mxu0 0
    %751 = vmatprep.subr.bf16.mxu0 0
    %752 = vmatpush2.bf16.msra.mxu0 0
    %753 = vmatprep.subr.bf16.mxu0 0
    %754 = vmatpush2.bf16.msra.mxu0 0
    %755 = vmatprep.subr.bf16.mxu0 0
    %756 = vmatpush2.bf16.msra.mxu0 0
    %757 = vmatprep.subr.bf16.mxu0 0
    %758 = vmatpush2.bf16.msra.mxu0 0
    %759 = vmatprep.subr.bf16.mxu0 0
    %760 = vmatpush2.bf16.msra.mxu0 0
    %761 = vmatprep.subr.bf16.mxu0 0
    %762 = vmatpush2.bf16.msra.mxu0 0
    %763 = vmatprep.subr.bf16.mxu0 0
    %764 = vmatpush2.bf16.msra.mxu0 0
    %765 = vmatprep.mubr.bf16.mxu0 0
    %766 = vmatmul.mubr.bf16.gmra.mxu0 %v731
    %v767 = vpop.f32.mrf.mxu0
    %v768 = vadd.f32 %v703, %v767
    %v769 = vpop.f32.mrf.mxu0
    %v770 = vpop.f32.mrf.mxu0
    %v771 = vpop.f32.mrf.mxu0
    %772 = vdwg.mxu0
    %773 = vst [vmem:[#allocation14] sm:$0x3] %v768
    // Predicated region
    $region78: #{tpu_custom_call.1} parent=1 // pred_check
      _
    $region79: #{tpu_custom_call.1} parent=1 // pred_check_branch
      %775 = sbr.rel (0) target = $region81
    $region80: #{tpu_custom_call.1} parent=1 // pred_region
      %s777 = ssub.s32 32, 32
      %778 = vsyncadd [#allocation4], %s777
      %s780 = sshll.u32 [#allocation14], 4
      %s781 = int_to_ptr.vmem [resolvable:$true] %s780
      %783 = dma.vmem_to_hbm [thread:$0]  %s781, 32, %s12, [#allocation4]
    $region81: #{tpu_custom_call.1} parent=1 // pred_fallthru
      _
    // Predicated region
    $region82: #{tpu_custom_call.1} parent=1 // pred_check
      _
    $region83: #{tpu_custom_call.1} parent=1 // pred_check_branch
      %785 = sbr.rel (0) target = $region85
    $region84: #{tpu_custom_call.1} parent=1 // pred_region
      %786 = dma.done [#allocation4], 32
    $region85: #{tpu_custom_call.1} parent=1 // pred_fallthru
      _
    %787 = vsyncpa [#allocation3], 1
    %788 = vsyncpa [#allocation6], 1
    %789 = vsyncpa [#allocation9], 1
    %790 = vsyncpa [#allocation12], 1
    %791 = vsyncpa [#allocation4], 1

</llo_original>
